<compile_context>
chip_gen: v6e
topology: v6e:2x2x1
jax: 0.10.0
libtpu: 0.0.40
codegen_flags: <defaults>
</compile_context>

<pallas_src>
import functools

import jax
import jax.numpy as jnp
import numpy as np
from jax.experimental import pallas as pl
from jax.experimental.pallas import tpu as pltpu


def _cdiv(a, b):
    return (a + b - 1) // b


def _round_up(x, m):
    return ((x + m - 1) // m) * m


def _label_smoothing_kernel(pred_ref, tgt_ref, out_ref,
                            m_sc, l_sc, sx_sc, xt_sc, xig_sc, *,
                            n_rows, n_classes, tile_n, tile_c,
                            confidence, smooth_val, ignore_index, use_ignore):
    i = pl.program_id(0)                 # row-tile index ("parallel")
    k = pl.program_id(1)                 # class-tile index (reduction, "arbitrary")
    nk = pl.num_programs(1)

    neg_big = jnp.float32(-3.0e38)

    @pl.when(k == 0)
    def _():
        m_sc[...] = jnp.full_like(m_sc, neg_big)
        l_sc[...] = jnp.zeros_like(l_sc)
        sx_sc[...] = jnp.zeros_like(sx_sc)
        xt_sc[...] = jnp.zeros_like(xt_sc)
        if use_ignore:
            xig_sc[...] = jnp.zeros_like(xig_sc)

    x = pred_ref[...].astype(jnp.float32)            # (tile_n, tile_c)
    t = tgt_ref[...]                                  # (tile_n, 1) int32

    # Tile-local column indices (no per-element `+ k*tile_c` add).
    col_local = jax.lax.broadcasted_iota(jnp.int32, x.shape, 1)
    t_local = t - k * tile_c                          # (tile_n, 1)

    def _accumulate(x_lse, x_sum):
        # Online log-sum-exp: exp args are always <= 0, no overflow possible.
        m_new = jnp.maximum(m_sc[...], jnp.max(x_lse, axis=-1, keepdims=True))
        alpha = jnp.exp(m_sc[...] - m_new)
        p = jnp.exp(x_lse - m_new)
        l_sc[...] = alpha * l_sc[...] + jnp.sum(p, axis=-1, keepdims=True)
        m_sc[...] = m_new
        # Linear accumulators (no true_dist / logp materialization).
        sx_sc[...] += jnp.sum(x_sum, axis=-1, keepdims=True)
        xt_sc[...] += jnp.sum(jnp.where(col_local == t_local, x, 0.0),
                              axis=-1, keepdims=True)

    ragged_c = (n_classes % tile_c) != 0
    if ragged_c:
        n_valid_last = n_classes % tile_c

        # Only the last class tile carries padded lanes -> only it pays the mask.
        @pl.when(k == nk - 1)
        def _():
            valid = col_local < n_valid_last
            _accumulate(jnp.where(valid, x, neg_big), jnp.where(valid, x, 0.0))

        @pl.when(k != nk - 1)
        def _():
            _accumulate(x, x)
    else:
        _accumulate(x, x)

    if use_ignore:
        # Only the single class tile that contains ignore_index does this work.
        ig_tile = ignore_index // tile_c
        ig_local = ignore_index - ig_tile * tile_c

        @pl.when(k == ig_tile)
        def _():
            xig_sc[...] += jnp.sum(jnp.where(col_local == ig_local, x, 0.0),
                                   axis=-1, keepdims=True)

    # ---- finalize: per-row loss written once, at the last class tile ----
    @pl.when(k == nk - 1)
    def _():
        lse = m_sc[...] + jnp.log(l_sc[...])          # (tile_n, 1)
        if use_ignore:
            mass = jnp.float32(1.0 - smooth_val)      # ignore column zeroed in true_dist
            dot_x = (smooth_val * (sx_sc[...] - xig_sc[...])
                     + (confidence - smooth_val) * xt_sc[...])
            row_loss = mass * lse - dot_x
            row_loss = jnp.where(t == ignore_index, 0.0, row_loss)
        else:
            dot_x = smooth_val * sx_sc[...] + (confidence - smooth_val) * xt_sc[...]
            row_loss = lse - dot_x                    # mass == 1.0
        if n_rows % tile_n:
            # Zero rows of the ragged last row tile (their pred data is garbage;
            # select also scrubs any NaN/Inf that garbage produced).
            row_id = i * tile_n + jax.lax.broadcasted_iota(jnp.int32, (tile_n, 1), 0)
            row_loss = jnp.where(row_id < n_rows, row_loss, 0.0)
        out_ref[...] = row_loss


def label_smoothing_loss(pred, target, *, classes, smoothing=0.0,
                         ignore_index=None, tile_n=256, tile_c=8192):
    """pred: (N, C) float (f32 or bf16), target: (N,) int. Returns scalar loss."""
    N, C = pred.shape
    assert C == classes, (C, classes)

    # Match PyTorch `if self.ignore_index:` (0 or None disables ignore handling).
    use_ignore = bool(ignore_index)
    ig = int(ignore_index) if use_ignore else -1

    itemsize = np.dtype(pred.dtype).itemsize

    # --- VMEM budget (generation-aware: v7x 64 MiB, v5e/v6e 128 MiB). ---
    try:
        vmem_cap = int(pltpu.get_tpu_info().vmem_capacity_bytes)
    except Exception:
        vmem_cap = 128 << 20
    vmem_budget = max(24 << 20, vmem_cap - (16 << 20))          # leave headroom
    max_block_bytes = max(1 << 20, (vmem_budget - (8 << 20)) // 2)

    # --- row tile: multiple of 8; aim for >= 2 row tiles so v7x's two
    #     TensorCores both stream (megacore sharding of the "parallel" axis). ---
    tile_n = max(8, (int(tile_n) // 8) * 8)
    tile_n = min(tile_n, max(8, _round_up(_cdiv(N, 2), 8)))

    # --- class tile: the full class dim if one block fits, else a multiple of 128
    #     (kernel masks the ragged last tile; pred is never padded / copied). ---
    if C <= tile_c and tile_n * C * itemsize <= max_block_bytes:
        tile_c = C
    else:
        tile_c = max(128, (min(int(tile_c), C) // 128) * 128)
        while tile_n * tile_c * itemsize > max_block_bytes and tile_c > 128:
            tile_c = max(128, ((tile_c // 2) // 128) * 128)

    n_row_tiles = _cdiv(N, tile_n)
    n_cls_tiles = _cdiv(C, tile_c)
    grid = (n_row_tiles, n_cls_tiles)

    # Target / output are tiny: pad their rows so those blocks are never ragged.
    Np = n_row_tiles * tile_n
    tgt_p = target.reshape(N, 1).astype(jnp.int32)
    if Np != N:
        tgt_p = jnp.pad(tgt_p, ((0, Np - N), (0, 0)))

    kernel = functools.partial(
        _label_smoothing_kernel,
        n_rows=N, n_classes=C, tile_n=tile_n, tile_c=tile_c,
        confidence=float(1.0 - smoothing),
        smooth_val=float(smoothing / (classes - 1)),
        ignore_index=ig, use_ignore=use_ignore)

    block_bytes = tile_n * tile_c * itemsize
    vmem_limit = int(min(vmem_budget, max(32 << 20, 2 * block_bytes + (12 << 20))))

    cost = pl.CostEstimate(
        flops=int(8 * N * C),
        transcendentals=int(N * C),
        bytes_accessed=int(N * C * itemsize + 8 * N),
    )

    row_loss = pl.pallas_call(
        kernel,
        out_shape=jax.ShapeDtypeStruct((Np, 1), jnp.float32),
        grid_spec=pltpu.PrefetchScalarGridSpec(
            num_scalar_prefetch=0,
            grid=grid,
            in_specs=[
                pl.BlockSpec((tile_n, tile_c), lambda i, k: (i, k)),   # pred (streamed once)
                pl.BlockSpec((tile_n, 1), lambda i, k: (i, 0)),        # target
            ],
            out_specs=pl.BlockSpec((tile_n, 1), lambda i, k: (i, 0)),  # per-row loss
            scratch_shapes=[pltpu.VMEM((tile_n, 1), jnp.float32)] * 5,
        ),
        compiler_params=pltpu.CompilerParams(
            dimension_semantics=("parallel", "arbitrary"),
            vmem_limit_bytes=vmem_limit),
        cost_estimate=cost,
    )(pred, tgt_p)

    # Mean over all N rows (matches the PyTorch module even with ignore_index).
    return jnp.sum(row_loss) / jnp.float32(N)


def _reference(pred, target, *, classes, smoothing, ignore_index=None):
    """Pure numpy reference mirroring the PyTorch module (incl. truthy ignore)."""
    pred = np.asarray(pred, dtype=np.float64)
    target = np.asarray(target)
    x = pred - pred.max(axis=-1, keepdims=True)
    logp = x - np.log(np.exp(x).sum(axis=-1, keepdims=True))
    true_dist = np.full_like(logp, smoothing / (classes - 1))
    true_dist[np.arange(pred.shape[0]), target] = 1.0 - smoothing
    if ignore_index:  # PyTorch module uses truthiness here
        true_dist[:, ignore_index] = 0.0
        true_dist[target == ignore_index, :] = 0.0
    return float(np.mean(np.sum(-true_dist * logp, axis=-1)))


if __name__ == "__main__":
    key = jax.random.PRNGKey(0)
    k1, k2, k3, k4, k5, k6 = jax.random.split(key, 6)

    # Case 1: small, no ignore_index; single row tile, single (full-C) class tile.
    N1, C1, sm1 = 8, 32, 0.1
    pred1 = jax.random.normal(k1, (N1, C1), dtype=jnp.float32)
    tgt1 = jax.random.randint(k2, (N1,), 0, C1, dtype=jnp.int32)
    loss1 = jax.block_until_ready(
        label_smoothing_loss(pred1, tgt1, classes=C1, smoothing=sm1))
    ref1 = _reference(np.array(pred1), np.array(tgt1), classes=C1, smoothing=sm1)
    assert np.allclose(float(loss1), ref1, rtol=1e-4, atol=1e-4), (float(loss1), ref1)

    # Case 2: multiple row tiles + ragged last class tile + ignore_index.
    N2, C2, sm2, ig2 = 24, 300, 0.2, 3
    pred2 = jax.random.normal(k3, (N2, C2), dtype=jnp.float32)
    tgt2 = jax.random.randint(k4, (N2,), 0, C2, dtype=jnp.int32)
    tgt2 = tgt2.at[0].set(ig2)  # exercise the ignored-row path
    loss2 = jax.block_until_ready(
        label_smoothing_loss(pred2, tgt2, classes=C2, smoothing=sm2,
                             ignore_index=ig2, tile_n=8, tile_c=128))
    ref2 = _reference(np.array(pred2), np.array(tgt2), classes=C2, smoothing=sm2,
                      ignore_index=ig2)
    assert np.allclose(float(loss2), ref2, rtol=1e-4, atol=1e-4), (float(loss2), ref2)

    # Case 3: bf16 logits, ragged last row tile AND ragged last class tile.
    N3, C3, sm3 = 21, 260, 0.15
    pred3 = jax.random.normal(k5, (N3, C3), dtype=jnp.bfloat16)
    tgt3 = jax.random.randint(k6, (N3,), 0, C3, dtype=jnp.int32)
    loss3 = jax.block_until_ready(
        label_smoothing_loss(pred3, tgt3, classes=C3, smoothing=sm3,
                             tile_n=8, tile_c=128))
    ref3 = _reference(np.array(pred3.astype(jnp.float32)), np.array(tgt3),
                      classes=C3, smoothing=sm3)
    assert np.allclose(float(loss3), ref3, rtol=2e-3, atol=2e-3), (float(loss3), ref3)

    print("KERNEL_OK")
</pallas_src>

<mosaic_0001>
module attributes {stable_mosaic.version = 11 : i64} {
  func.func @_label_smoothing_kernel(%arg0: i32, %arg1: i32, %arg2: memref<8x32xf32, #tpu.memory_space<vmem>>, %arg3: memref<8x1xi32, #tpu.memory_space<vmem>>, %arg4: memref<8x1xf32, #tpu.memory_space<vmem>>, %arg5: memref<8x1xf32, #tpu.memory_space<vmem>>, %arg6: memref<8x1xf32, #tpu.memory_space<vmem>>, %arg7: memref<8x1xf32, #tpu.memory_space<vmem>>, %arg8: memref<8x1xf32, #tpu.memory_space<vmem>>, %arg9: memref<8x1xf32, #tpu.memory_space<vmem>>) attributes {dimension_semantics = [#tpu.dimension_semantics<parallel>, #tpu.dimension_semantics<arbitrary>], iteration_bounds = array<i64: 1, 1>, scalar_prefetch = 0 : i64, scratch_operands = 5 : i64, tpu.core_type = #tpu.core_type<tc>, window_params = [{transform_indices = @transform_0, window_bounds = array<i64: 8, 32>}, {transform_indices = @transform_1, window_bounds = array<i64: 8, 1>}, {transform_indices = @transform_2, window_bounds = array<i64: 8, 1>}]} {
    %c0_i32 = arith.constant 0 : i32
    %0 = arith.cmpi eq, %arg1, %c0_i32 : i32
    %1 = arith.extui %0 : i1 to i32
    %cst = arith.constant -3.000000e+38 : f32
    %c0_i32_0 = arith.constant 0 : i32
    %2 = arith.cmpi ne, %1, %c0_i32_0 : i32
    scf.if %2 {
      %43 = vector.broadcast %cst : f32 to vector<8x1xf32>
      %c0_29 = arith.constant 0 : index
      %c0_30 = arith.constant 0 : index
      %44 = vector.load %arg5[%c0_29, %c0_30] : memref<8x1xf32, #tpu.memory_space<vmem>>, vector<8x1xf32>
      tpu.vector_store %arg5[%c0_29, %c0_30], %43 {strides = array<i32>} : memref<8x1xf32, #tpu.memory_space<vmem>>, vector<8x1xf32>,
      %cst_31 = arith.constant 0.000000e+00 : f32
      %45 = vector.broadcast %cst_31 : f32 to vector<8x1xf32>
      %c0_32 = arith.constant 0 : index
      %c0_33 = arith.constant 0 : index
      %46 = vector.load %arg6[%c0_32, %c0_33] : memref<8x1xf32, #tpu.memory_space<vmem>>, vector<8x1xf32>
      tpu.vector_store %arg6[%c0_32, %c0_33], %45 {strides = array<i32>} : memref<8x1xf32, #tpu.memory_space<vmem>>, vector<8x1xf32>,
      %cst_34 = arith.constant 0.000000e+00 : f32
      %47 = vector.broadcast %cst_34 : f32 to vector<8x1xf32>
      %c0_35 = arith.constant 0 : index
      %c0_36 = arith.constant 0 : index
      %48 = vector.load %arg7[%c0_35, %c0_36] : memref<8x1xf32, #tpu.memory_space<vmem>>, vector<8x1xf32>
      tpu.vector_store %arg7[%c0_35, %c0_36], %47 {strides = array<i32>} : memref<8x1xf32, #tpu.memory_space<vmem>>, vector<8x1xf32>,
      %cst_37 = arith.constant 0.000000e+00 : f32
      %49 = vector.broadcast %cst_37 : f32 to vector<8x1xf32>
      %c0_38 = arith.constant 0 : index
      %c0_39 = arith.constant 0 : index
      %50 = vector.load %arg8[%c0_38, %c0_39] : memref<8x1xf32, #tpu.memory_space<vmem>>, vector<8x1xf32>
      tpu.vector_store %arg8[%c0_38, %c0_39], %49 {strides = array<i32>} : memref<8x1xf32, #tpu.memory_space<vmem>>, vector<8x1xf32>,
    } else {
    }
    %c0 = arith.constant 0 : index
    %c0_1 = arith.constant 0 : index
    %3 = vector.load %arg2[%c0, %c0_1] : memref<8x32xf32, #tpu.memory_space<vmem>>, vector<8x32xf32>
    %c0_2 = arith.constant 0 : index
    %c0_3 = arith.constant 0 : index
    %4 = vector.load %arg3[%c0_2, %c0_3] : memref<8x1xi32, #tpu.memory_space<vmem>>, vector<8x1xi32>
    %5 = tpu.iota {dimensions = array<i32: 1>} : vector<8x32xi32>
    %c32_i32 = arith.constant 32 : i32
    %6 = arith.muli %arg1, %c32_i32 : i32
    %7 = vector.broadcast %6 : i32 to vector<8x1xi32>
    %8 = arith.subi %4, %7 : vector<8x1xi32>
    %c0_4 = arith.constant 0 : index
    %c0_5 = arith.constant 0 : index
    %9 = vector.load %arg5[%c0_4, %c0_5] : memref<8x1xf32, #tpu.memory_space<vmem>>, vector<8x1xf32>
    %cst_6 = arith.constant dense<0xFF800000> : vector<8xf32>
    %10 = vector.multi_reduction <maximumf>, %3, %cst_6 [1] : vector<8x32xf32> to vector<8xf32>
    %11 = vector.shape_cast %10 : vector<8xf32> to vector<8x1xf32>
    %12 = arith.maximumf %9, %11 : vector<8x1xf32>
    %c0_7 = arith.constant 0 : index
    %c0_8 = arith.constant 0 : index
    %13 = vector.load %arg5[%c0_7, %c0_8] : memref<8x1xf32, #tpu.memory_space<vmem>>, vector<8x1xf32>
    %14 = arith.subf %13, %12 : vector<8x1xf32>
    %15 = math.exp %14 : vector<8x1xf32>
    %16 = vector.broadcast %12 : vector<8x1xf32> to vector<8x32xf32>
    %17 = arith.subf %3, %16 : vector<8x32xf32>
    %18 = math.exp %17 : vector<8x32xf32>
    %c0_9 = arith.constant 0 : index
    %c0_10 = arith.constant 0 : index
    %19 = vector.load %arg6[%c0_9, %c0_10] : memref<8x1xf32, #tpu.memory_space<vmem>>, vector<8x1xf32>
    %20 = arith.mulf %15, %19 : vector<8x1xf32>
    %cst_11 = arith.constant dense<0.000000e+00> : vector<8xf32>
    %21 = vector.multi_reduction <add>, %18, %cst_11 [1] : vector<8x32xf32> to vector<8xf32>
    %22 = vector.shape_cast %21 : vector<8xf32> to vector<8x1xf32>
    %23 = arith.addf %20, %22 : vector<8x1xf32>
    %c0_12 = arith.constant 0 : index
    %c0_13 = arith.constant 0 : index
    %24 = vector.load %arg6[%c0_12, %c0_13] : memref<8x1xf32, #tpu.memory_space<vmem>>, vector<8x1xf32>
    tpu.vector_store %arg6[%c0_12, %c0_13], %23 {strides = array<i32>} : memref<8x1xf32, #tpu.memory_space<vmem>>, vector<8x1xf32>,
    %c0_14 = arith.constant 0 : index
    %c0_15 = arith.constant 0 : index
    %25 = vector.load %arg5[%c0_14, %c0_15] : memref<8x1xf32, #tpu.memory_space<vmem>>, vector<8x1xf32>
    tpu.vector_store %arg5[%c0_14, %c0_15], %12 {strides = array<i32>} : memref<8x1xf32, #tpu.memory_space<vmem>>, vector<8x1xf32>,
    %c0_16 = arith.constant 0 : index
    %c0_17 = arith.constant 0 : index
    %26 = vector.load %arg7[%c0_16, %c0_17] : memref<8x1xf32, #tpu.memory_space<vmem>>, vector<8x1xf32>
    %cst_18 = arith.constant dense<0.000000e+00> : vector<8xf32>
    %27 = vector.multi_reduction <add>, %3, %cst_18 [1] : vector<8x32xf32> to vector<8xf32>
    %28 = vector.shape_cast %27 : vector<8xf32> to vector<8x1xf32>
    %29 = arith.addf %26, %28 : vector<8x1xf32>
    %c0_19 = arith.constant 0 : index
    %c0_20 = arith.constant 0 : index
    %30 = vector.load %arg7[%c0_19, %c0_20] : memref<8x1xf32, #tpu.memory_space<vmem>>, vector<8x1xf32>
    tpu.vector_store %arg7[%c0_19, %c0_20], %29 {strides = array<i32>} : memref<8x1xf32, #tpu.memory_space<vmem>>, vector<8x1xf32>,
    %c0_21 = arith.constant 0 : index
    %c0_22 = arith.constant 0 : index
    %31 = vector.load %arg8[%c0_21, %c0_22] : memref<8x1xf32, #tpu.memory_space<vmem>>, vector<8x1xf32>
    %32 = vector.broadcast %8 : vector<8x1xi32> to vector<8x32xi32>
    %33 = arith.cmpi eq, %5, %32 : vector<8x32xi32>
    %cst_23 = arith.constant 0.000000e+00 : f32
    %34 = vector.broadcast %cst_23 : f32 to vector<8x32xf32>
    %35 = arith.select %33, %3, %34 : vector<8x32xi1>, vector<8x32xf32>
    %cst_24 = arith.constant dense<0.000000e+00> : vector<8xf32>
    %36 = vector.multi_reduction <add>, %35, %cst_24 [1] : vector<8x32xf32> to vector<8xf32>
    %37 = vector.shape_cast %36 : vector<8xf32> to vector<8x1xf32>
    %38 = arith.addf %31, %37 : vector<8x1xf32>
    %c0_25 = arith.constant 0 : index
    %c0_26 = arith.constant 0 : index
    %39 = vector.load %arg8[%c0_25, %c0_26] : memref<8x1xf32, #tpu.memory_space<vmem>>, vector<8x1xf32>
    tpu.vector_store %arg8[%c0_25, %c0_26], %38 {strides = array<i32>} : memref<8x1xf32, #tpu.memory_space<vmem>>, vector<8x1xf32>,
    %c0_i32_27 = arith.constant 0 : i32
    %40 = arith.cmpi eq, %arg1, %c0_i32_27 : i32
    %41 = arith.extui %40 : i1 to i32
    %c0_i32_28 = arith.constant 0 : i32
    %42 = arith.cmpi ne, %41, %c0_i32_28 : i32
    scf.if %42 {
      %c0_29 = arith.constant 0 : index
      %c0_30 = arith.constant 0 : index
      %43 = vector.load %arg5[%c0_29, %c0_30] : memref<8x1xf32, #tpu.memory_space<vmem>>, vector<8x1xf32>
      %c0_31 = arith.constant 0 : index
      %c0_32 = arith.constant 0 : index
      %44 = vector.load %arg6[%c0_31, %c0_32] : memref<8x1xf32, #tpu.memory_space<vmem>>, vector<8x1xf32>
      %45 = math.log %44 : vector<8x1xf32>
      %46 = arith.addf %43, %45 : vector<8x1xf32>
      %c0_33 = arith.constant 0 : index
      %c0_34 = arith.constant 0 : index
      %47 = vector.load %arg7[%c0_33, %c0_34] : memref<8x1xf32, #tpu.memory_space<vmem>>, vector<8x1xf32>
      %cst_35 = arith.constant 0.0032258064 : f32
      %48 = vector.broadcast %cst_35 : f32 to vector<8x1xf32>
      %49 = arith.mulf %48, %47 : vector<8x1xf32>
      %c0_36 = arith.constant 0 : index
      %c0_37 = arith.constant 0 : index
      %50 = vector.load %arg8[%c0_36, %c0_37] : memref<8x1xf32, #tpu.memory_space<vmem>>, vector<8x1xf32>
      %cst_38 = arith.constant 0.896774172 : f32
      %51 = vector.broadcast %cst_38 : f32 to vector<8x1xf32>
      %52 = arith.mulf %51, %50 : vector<8x1xf32>
      %53 = arith.addf %49, %52 : vector<8x1xf32>
      %54 = arith.subf %46, %53 : vector<8x1xf32>
      %c0_39 = arith.constant 0 : index
      %c0_40 = arith.constant 0 : index
      %55 = vector.load %arg4[%c0_39, %c0_40] : memref<8x1xf32, #tpu.memory_space<vmem>>, vector<8x1xf32>
      tpu.vector_store %arg4[%c0_39, %c0_40], %54 {strides = array<i32>} : memref<8x1xf32, #tpu.memory_space<vmem>>, vector<8x1xf32>,
    } else {
    }
    return
  }
  func.func @transform_0(%arg0: i32, %arg1: i32) -> (i32, i32) {
    %c0_i32 = arith.constant 0 : i32
    return %arg0, %arg1 : i32, i32
  }
  func.func @transform_1(%arg0: i32, %arg1: i32) -> (i32, i32) {
    %c0_i32 = arith.constant 0 : i32
    %c0_i32_0 = arith.constant 0 : i32
    return %arg0, %c0_i32 : i32, i32
  }
  func.func @transform_2(%arg0: i32, %arg1: i32) -> (i32, i32) {
    %c0_i32 = arith.constant 0 : i32
    %c0_i32_0 = arith.constant 0 : i32
    return %arg0, %c0_i32 : i32, i32
  }
}

</mosaic_0001>

<llo_original>
// kernel: tpu_custom_call.1
$region0: #{tpu_custom_call.1}
  #allocation0 [shape = 'u32[]', space=smem, size = 0x4, offset = 0x4, fixed_abs, tag = 'smem constant byte address 0x4 - core index']
  #allocation1 [shape = 'u32[144,128]{1,0:T(1,128)}', space=vmem, size = 0x12000, scoped, tag = 'internal scratch']
  #allocation2 [shape = 'f32[8,1]{1,0:T(8,128)}', space=vmem, size = 0x1000, scoped, tag = 'scratch operand']
  #allocation3 [shape = 'f32[8,1]{1,0:T(8,128)}', space=vmem, size = 0x1000, scoped, tag = 'scratch operand']
  #allocation4 [shape = 'f32[8,1]{1,0:T(8,128)}', space=vmem, size = 0x1000, scoped, tag = 'scratch operand']
  #allocation5 [shape = 'f32[8,1]{1,0:T(8,128)}', space=vmem, size = 0x1000, scoped, tag = 'scratch operand']
  #allocation6 [shape = 'f32[8,1]{1,0:T(8,128)}', space=vmem, size = 0x1000, scoped, tag = 'scratch operand']
  %s0 = inlined_call_operand.vmem [shape: f32[8,32], index: 0, kind: input, shape index: {}]
  %s1 = inlined_call_operand.vmem [shape: s32[8,1], index: 1, kind: input, shape index: {}]
  %s2 = inlined_call_operand.vmem [shape: f32[8,1], index: 2, kind: output, shape index: {}]
  %s3 = sld [smem:[#allocation0]]
  $region26: #{tpu_custom_call.1} parent=0
    _
  %s5 = ssub.s32 1, %s3
  %s6 = scalar_select 0, %s5, %s3
  // Predicated region
  $region2: #{tpu_custom_call.1} parent=0 // pred_check
    _
  $region3: #{tpu_custom_call.1} parent=0 // pred_check_branch
    %8 = sbr.rel (0) target = $region5
  $region4: #{tpu_custom_call.1} parent=0 // pred_region
    _
  $region5: #{tpu_custom_call.1} parent=0 // pred_fallthru
    _
  // Predicated region
  $region6: #{tpu_custom_call.1} parent=0 // pred_check
    _
  $region7: #{tpu_custom_call.1} parent=0 // pred_check_branch
    %10 = sbr.rel (0) target = $region9
  $region8: #{tpu_custom_call.1} parent=0 // pred_region
    _
  $region9: #{tpu_custom_call.1} parent=0 // pred_fallthru
    _
  %p11 = scmp.eq.s32.totalorder 0, 0
  // Predicated region
  $region10: #{tpu_custom_call.1} parent=0 // pred_check
    %p12 = pneg %p11
  $region11: #{tpu_custom_call.1} parent=0 // pred_check_branch
    %14 = sbr.rel (%p12) target = $region13
  $region12: #{tpu_custom_call.1} parent=0 // pred_region
    %vm15 = vcmask 7168
    %16 = vst.msk [vmem:[#allocation2] sm:$0xff] %vm15, -3e+38
    %17 = vst.msk [vmem:[#allocation3] sm:$0xff] %vm15, 0.0
    %18 = vst.msk [vmem:[#allocation4] sm:$0xff] %vm15, 0.0
    %19 = vst.msk [vmem:[#allocation5] sm:$0xff] %vm15, 0.0
  $region13: #{tpu_custom_call.1} parent=0 // pred_fallthru
    _
  %v20 = vld [vmem:[%s0] sm:$0xff]
  %v21 = vld [vmem:[%s1] sm:$0xff]
  %v22 = vlaneseq
  %v23 = vand.u32 %v22, 127
  %s24 = smul.u32 0, 32
  %v25 = vstv %s24
  %v26 = vsub.s32 %v21, %v25
  %v27 = vld [vmem:[#allocation2] sm:$0xff]
  %vm28 = vcmask 261120
  %v29 = vsel %vm28, %v20, -inf
  %30 = vmax.xlane.f32.xlu0 %v29
  %v31 = vpop.xlane.xlu0 %30
  %v32 = vmax.f32 %v27, %v31
  %v33 = vsub.f32 %v27, %v32
  %v34 = vmul.f32 %v33, 1.442695
  %v35 = vpow.pop %v34
  %37 = vset.pattern.permute.xlu0 0
  %38 = vperm.xlu0 %37, %v32
  %v39 = vpop.permute.xlu0 %38
  %v41 = vsub.f32 %v20, %v39
  %v42 = vmul.f32 %v41, 1.442695
  %v43 = vpow.pop %v42
  %v44 = vld [vmem:[#allocation3] sm:$0xff]
  %v45 = vmul.f32 %v35, %v44
  %v46 = vsel %vm28, %v43, 0.0
  %47 = vadd.xlane.f32.xlu0 %v46
  %v48 = vpop.xlane.xlu0 %47
  %v49 = vadd.f32 %v45, %v48
  %vm50 = vcmask 7168
  %51 = vst.msk [vmem:[#allocation3] sm:$0xff] %vm50, %v49
  %52 = vst.msk [vmem:[#allocation2] sm:$0xff] %vm50, %v32
  %v53 = vld [vmem:[#allocation4] sm:$0xff]
  %v54 = vsel %vm28, %v20, 0.0
  %55 = vadd.xlane.f32.xlu0 %v54
  %v56 = vpop.xlane.xlu0 %55
  %v57 = vadd.f32 %v53, %v56
  %58 = vst.msk [vmem:[#allocation4] sm:$0xff] %vm50, %v57
  %v59 = vld [vmem:[#allocation5] sm:$0xff]
  %60 = vset.pattern.permute.xlu0 0
  %61 = vperm.xlu0 %60, %v26
  %v62 = vpop.permute.xlu0 %61
  %vm63 = vcmp.eq.s32.totalorder %v23, %v62
  %v64 = vsel %vm63, %v20, 0.0
  %v65 = vsel %vm28, %v64, 0.0
  %66 = vadd.xlane.f32.xlu0 %v65
  %v67 = vpop.xlane.xlu0 %66
  %v68 = vadd.f32 %v59, %v67
  %69 = vst.msk [vmem:[#allocation5] sm:$0xff] %vm50, %v68
  // Predicated region
  $region14: #{tpu_custom_call.1} parent=0 // pred_check
    %p70 = pneg %p11
  $region15: #{tpu_custom_call.1} parent=0 // pred_check_branch
    %72 = sbr.rel (%p70) target = $region17
  $region16: #{tpu_custom_call.1} parent=0 // pred_region
    %v73 = vld [vmem:[#allocation2] sm:$0xff]
    %v74 = vld [vmem:[#allocation3] sm:$0xff]
    %v75 = vlog2.pop %v74
    %v76 = vmul.f32 %v75, 0.6931472
    %v77 = vadd.f32 %v73, %v76
    %v78 = vld [vmem:[#allocation4] sm:$0xff]
    %v79 = vmul.f32 %v78, 0.0032258064
    %v80 = vld [vmem:[#allocation5] sm:$0xff]
    %v81 = vmul.f32 %v80, 0.8967742
    %v82 = vadd.f32 %v79, %v81
    %v83 = vsub.f32 %v77, %v82
    %84 = vst.msk [vmem:[%s2] sm:$0xff] %vm50, %v83
  $region17: #{tpu_custom_call.1} parent=0 // pred_fallthru
    _
  // Predicated region
  $region18: #{tpu_custom_call.1} parent=0 // pred_check
    _
  $region19: #{tpu_custom_call.1} parent=0 // pred_check_branch
    %86 = sbr.rel (0) target = $region21
  $region20: #{tpu_custom_call.1} parent=0 // pred_region
    _
  $region21: #{tpu_custom_call.1} parent=0 // pred_fallthru
    _
  // Predicated region
  $region22: #{tpu_custom_call.1} parent=0 // pred_check
    _
  $region23: #{tpu_custom_call.1} parent=0 // pred_check_branch
    %88 = sbr.rel (0) target = $region25
  $region24: #{tpu_custom_call.1} parent=0 // pred_region
    _
  $region25: #{tpu_custom_call.1} parent=0 // pred_fallthru
    _

</llo_original>
